<compile_context>
chip_gen: v5e
topology: v5e:2x2
jax: 0.10.0
libtpu: 0.0.40
codegen_flags: <defaults>
</compile_context>

<pallas_src>
import jax
import jax.numpy as jnp
from jax.experimental import pallas as pl
from jax.experimental.pallas import tpu as pltpu

# ----------------------------- config ---------------------------------------
RANK = 32          # config.rank
MAX_LENGTH = 8     # config.max_length
NUM_CLASSES = 4    # config.num_classes
CTX_DIM = 5        # context_info last dim (fixed by Linear(5, rank))
BATCH = 2
OUT_PAD = 128      # lane-dense padded output width


# ----------------------------- kernel ---------------------------------------
def backbone_kernel(x_ref,               # (batch, ctx+seq)       bf16
                    we_ref, be_ref,      # (ctx+seq, 2*rank) bf16, (1, 2*rank) f32
                    w1_ref, b1_ref,      # (2*rank, rank)   bf16, (1, rank)    f32
                    w2_ref, b2_ref,      # (rank, rank)     bf16, (1, rank)    f32
                    w3_ref, b3_ref,      # (rank, OUT_PAD)  bf16, (1, OUT_PAD) f32
                    out_ref):            # (batch, OUT_PAD) f32
    f32 = jnp.float32
    bf16 = jnp.bfloat16

    # fused embeddings: [context_embeds | seq_embeds] in a single MXU op
    # (block-diagonal weight built in the wrapper; mathematically identical to
    #  transfer(ctx) and lstm(seq) computed separately).
    e = jnp.dot(x_ref[...], we_ref[...], preferred_element_type=f32) + be_ref[...]

    # predictor layer 1 (the concat is already materialized in `e`)
    h1 = jnp.dot(e.astype(bf16), w1_ref[...], preferred_element_type=f32) + b1_ref[...]
    h1 = jnp.maximum(h1, 0.0)

    # predictor layer 2
    h2 = jnp.dot(h1.astype(bf16), w2_ref[...], preferred_element_type=f32) + b2_ref[...]
    h2 = jnp.maximum(h2, 0.0)

    # predictor layer 3 — lane-dense (padded to OUT_PAD) so the store is unmasked
    y = jnp.dot(h2.astype(bf16), w3_ref[...], preferred_element_type=f32) + b3_ref[...]
    out_ref[...] = y.astype(out_ref.dtype)


# ----------------------------- wrapper ---------------------------------------
def backbone_forward(context_info, seq_input, params):
    (wt, bt, wl, bl, w1, b1, w2, b2, w3, b3) = params
    batch = context_info.shape[0]
    rank = wt.shape[1]
    ctx_dim = wt.shape[0]
    seq_dim = wl.shape[0]
    n_cls = w3.shape[1]
    bf16 = jnp.bfloat16

    # --- one-time XLA weight prep (outside the kernel) -----------------------
    # block-diagonal fused embedding weight: [[wt, 0], [0, wl]]
    w_emb = jnp.zeros((ctx_dim + seq_dim, 2 * rank), jnp.float32)
    w_emb = w_emb.at[:ctx_dim, :rank].set(wt)
    w_emb = w_emb.at[ctx_dim:, rank:].set(wl)
    b_emb = jnp.concatenate([bt, bl], axis=-1)                 # (1, 2*rank)

    # lane-dense padded final layer (zero columns beyond num_classes)
    w3p = jnp.zeros((w3.shape[0], OUT_PAD), jnp.float32).at[:, :n_cls].set(w3)
    b3p = jnp.zeros((1, OUT_PAD), jnp.float32).at[:, :n_cls].set(b3)

    # fused activation input: [context_info | seq_input]
    x_cat = jnp.concatenate([context_info, seq_input], axis=-1)

    args = (
        x_cat.astype(bf16),
        w_emb.astype(bf16), b_emb,
        w1.astype(bf16), b1,
        w2.astype(bf16), b2,
        w3p.astype(bf16), b3p,
    )

    vmem = pl.BlockSpec(memory_space=pltpu.MemorySpace.VMEM)
    out_pad = pl.pallas_call(
        backbone_kernel,
        out_shape=jax.ShapeDtypeStruct((batch, OUT_PAD), jnp.float32),
        in_specs=[vmem] * len(args),
        out_specs=vmem,
    )(*args)
    # slice the real classes back out (pure XLA slice, cheap)
    return out_pad[:, :n_cls]


# ----------------------------- param init ------------------------------------
def init_params(key):
    """Deterministic synthetic init (xavier-uniform style for weights)."""
    def xavier(k, fan_in, fan_out):
        lim = jnp.sqrt(6.0 / (fan_in + fan_out))
        return jax.random.uniform(k, (fan_in, fan_out), jnp.float32, -lim, lim)

    ks = jax.random.split(key, 5)
    wt = xavier(ks[0], CTX_DIM, RANK)
    bt = jnp.zeros((1, RANK), jnp.float32)
    wl = xavier(ks[1], MAX_LENGTH, RANK)
    bl = jnp.zeros((1, RANK), jnp.float32)
    w1 = xavier(ks[2], 2 * RANK, RANK)
    b1 = jnp.zeros((1, RANK), jnp.float32)
    w2 = xavier(ks[3], RANK, RANK)
    b2 = jnp.zeros((1, RANK), jnp.float32)
    w3 = xavier(ks[4], RANK, NUM_CLASSES)
    b3 = jnp.zeros((1, NUM_CLASSES), jnp.float32)
    return (wt, bt, wl, bl, w1, b1, w2, b2, w3, b3)


def reference_forward(context_info, seq_input, params):
    """Pure-f32 reference matching the PyTorch Backbone forward."""
    (wt, bt, wl, bl, w1, b1, w2, b2, w3, b3) = params
    ce = context_info @ wt + bt
    se = seq_input @ wl + bl
    x = jnp.concatenate([ce, se], axis=-1)
    h1 = jax.nn.relu(x @ w1 + b1)
    h2 = jax.nn.relu(h1 @ w2 + b2)
    return h2 @ w3 + b3


# ----------------------------- main -------------------------------------------
if __name__ == "__main__":
    key = jax.random.PRNGKey(0)
    k_ctx, k_seq, k_par = jax.random.split(key, 3)

    context_info = jax.random.normal(k_ctx, (BATCH, CTX_DIM), jnp.float32)
    seq_input = jax.random.normal(k_seq, (BATCH, MAX_LENGTH), jnp.float32)
    params = init_params(k_par)

    y = backbone_forward(context_info, seq_input, params)
    y = jax.block_until_ready(y)

    y_ref = reference_forward(context_info, seq_input, params)
    assert y.shape == (BATCH, NUM_CLASSES)
    # bf16 MXU inputs with f32 accumulation -> relaxed tolerance vs. f32 reference
    assert jnp.allclose(y, y_ref, atol=5e-2, rtol=5e-2), (
        f"max abs err {jnp.max(jnp.abs(y - y_ref))}")

    print("KERNEL_OK")
</pallas_src>

<mosaic_0001>
module attributes {stable_mosaic.version = 11 : i64} {
  func.func @backbone_kernel(%arg0: memref<2x13xbf16, #tpu.memory_space<vmem>>, %arg1: memref<13x64xbf16, #tpu.memory_space<vmem>>, %arg2: memref<1x64xf32, #tpu.memory_space<vmem>>, %arg3: memref<64x32xbf16, #tpu.memory_space<vmem>>, %arg4: memref<1x32xf32, #tpu.memory_space<vmem>>, %arg5: memref<32x32xbf16, #tpu.memory_space<vmem>>, %arg6: memref<1x32xf32, #tpu.memory_space<vmem>>, %arg7: memref<32x128xbf16, #tpu.memory_space<vmem>>, %arg8: memref<1x128xf32, #tpu.memory_space<vmem>>, %arg9: memref<2x128xf32, #tpu.memory_space<vmem>>) attributes {dimension_semantics = [], scalar_prefetch = 0 : i64, scratch_operands = 0 : i64, tpu.core_type = #tpu.core_type<tc>} {
    %c0 = arith.constant 0 : index
    %c0_0 = arith.constant 0 : index
    %0 = vector.load %arg0[%c0, %c0_0] : memref<2x13xbf16, #tpu.memory_space<vmem>>, vector<2x13xbf16>
    %c0_1 = arith.constant 0 : index
    %c0_2 = arith.constant 0 : index
    %1 = vector.load %arg1[%c0_1, %c0_2] : memref<13x64xbf16, #tpu.memory_space<vmem>>, vector<13x64xbf16>
    %cst = arith.constant dense<0.000000e+00> : vector<2x64xf32>
    %2 = tpu.matmul %0, %1, %cst {dimension_numbers = #tpu.dot_dimension_numbers<[1], [0], [0], [1], [0, 0, 1, 1], [], []>} : vector<2x13xbf16>, vector<13x64xbf16>, vector<2x64xf32> -> vector<2x64xf32>
    %c0_3 = arith.constant 0 : index
    %c0_4 = arith.constant 0 : index
    %3 = vector.load %arg2[%c0_3, %c0_4] : memref<1x64xf32, #tpu.memory_space<vmem>>, vector<1x64xf32>
    %4 = vector.broadcast %3 : vector<1x64xf32> to vector<2x64xf32>
    %5 = arith.addf %2, %4 : vector<2x64xf32>
    %6 = arith.truncf %5 : vector<2x64xf32> to vector<2x64xbf16>
    %c0_5 = arith.constant 0 : index
    %c0_6 = arith.constant 0 : index
    %7 = vector.load %arg3[%c0_5, %c0_6] : memref<64x32xbf16, #tpu.memory_space<vmem>>, vector<64x32xbf16>
    %cst_7 = arith.constant dense<0.000000e+00> : vector<2x32xf32>
    %8 = tpu.matmul %6, %7, %cst_7 {dimension_numbers = #tpu.dot_dimension_numbers<[1], [0], [0], [1], [0, 0, 1, 1], [], []>} : vector<2x64xbf16>, vector<64x32xbf16>, vector<2x32xf32> -> vector<2x32xf32>
    %c0_8 = arith.constant 0 : index
    %c0_9 = arith.constant 0 : index
    %9 = vector.load %arg4[%c0_8, %c0_9] : memref<1x32xf32, #tpu.memory_space<vmem>>, vector<1x32xf32>
    %10 = vector.broadcast %9 : vector<1x32xf32> to vector<2x32xf32>
    %11 = arith.addf %8, %10 : vector<2x32xf32>
    %cst_10 = arith.constant 0.000000e+00 : f32
    %12 = vector.broadcast %cst_10 : f32 to vector<2x32xf32>
    %13 = arith.maximumf %11, %12 : vector<2x32xf32>
    %14 = arith.truncf %13 : vector<2x32xf32> to vector<2x32xbf16>
    %c0_11 = arith.constant 0 : index
    %c0_12 = arith.constant 0 : index
    %15 = vector.load %arg5[%c0_11, %c0_12] : memref<32x32xbf16, #tpu.memory_space<vmem>>, vector<32x32xbf16>
    %cst_13 = arith.constant dense<0.000000e+00> : vector<2x32xf32>
    %16 = tpu.matmul %14, %15, %cst_13 {dimension_numbers = #tpu.dot_dimension_numbers<[1], [0], [0], [1], [0, 0, 1, 1], [], []>} : vector<2x32xbf16>, vector<32x32xbf16>, vector<2x32xf32> -> vector<2x32xf32>
    %c0_14 = arith.constant 0 : index
    %c0_15 = arith.constant 0 : index
    %17 = vector.load %arg6[%c0_14, %c0_15] : memref<1x32xf32, #tpu.memory_space<vmem>>, vector<1x32xf32>
    %18 = vector.broadcast %17 : vector<1x32xf32> to vector<2x32xf32>
    %19 = arith.addf %16, %18 : vector<2x32xf32>
    %cst_16 = arith.constant 0.000000e+00 : f32
    %20 = vector.broadcast %cst_16 : f32 to vector<2x32xf32>
    %21 = arith.maximumf %19, %20 : vector<2x32xf32>
    %22 = arith.truncf %21 : vector<2x32xf32> to vector<2x32xbf16>
    %c0_17 = arith.constant 0 : index
    %c0_18 = arith.constant 0 : index
    %23 = vector.load %arg7[%c0_17, %c0_18] : memref<32x128xbf16, #tpu.memory_space<vmem>>, vector<32x128xbf16>
    %cst_19 = arith.constant dense<0.000000e+00> : vector<2x128xf32>
    %24 = tpu.matmul %22, %23, %cst_19 {dimension_numbers = #tpu.dot_dimension_numbers<[1], [0], [0], [1], [0, 0, 1, 1], [], []>} : vector<2x32xbf16>, vector<32x128xbf16>, vector<2x128xf32> -> vector<2x128xf32>
    %c0_20 = arith.constant 0 : index
    %c0_21 = arith.constant 0 : index
    %25 = vector.load %arg8[%c0_20, %c0_21] : memref<1x128xf32, #tpu.memory_space<vmem>>, vector<1x128xf32>
    %26 = vector.broadcast %25 : vector<1x128xf32> to vector<2x128xf32>
    %27 = arith.addf %24, %26 : vector<2x128xf32>
    %c0_22 = arith.constant 0 : index
    %c0_23 = arith.constant 0 : index
    %28 = vector.load %arg9[%c0_22, %c0_23] : memref<2x128xf32, #tpu.memory_space<vmem>>, vector<2x128xf32>
    tpu.vector_store %arg9[%c0_22, %c0_23], %27 {strides = array<i32>} : memref<2x128xf32, #tpu.memory_space<vmem>>, vector<2x128xf32>,
    return
  }
}

</mosaic_0001>

<llo_original>
// kernel: tpu_custom_call.1
$region0: #{tpu_custom_call.1}
  #allocation0 [shape = 'u32[]', space=smem, size = 0x4, offset = 0x4, fixed_abs, tag = 'smem constant byte address 0x4 - core index']
  #allocation1 [shape = 'u32[72,128]{1,0:T(1,128)}', space=vmem, size = 0x9000, scoped, tag = 'internal scratch']
  %s0 = inlined_call_operand.vmem [shape: bf16[2,13], index: 0, kind: input, shape index: {}]
  %s1 = inlined_call_operand.vmem [shape: bf16[13,64], index: 1, kind: input, shape index: {}]
  %s2 = inlined_call_operand.vmem [shape: f32[1,64], index: 2, kind: input, shape index: {}]
  %s3 = inlined_call_operand.vmem [shape: bf16[64,32], index: 3, kind: input, shape index: {}]
  %s4 = inlined_call_operand.vmem [shape: f32[1,32], index: 4, kind: input, shape index: {}]
  %s5 = inlined_call_operand.vmem [shape: bf16[32,32], index: 5, kind: input, shape index: {}]
  %s6 = inlined_call_operand.vmem [shape: f32[1,32], index: 6, kind: input, shape index: {}]
  %s7 = inlined_call_operand.vmem [shape: bf16[32,128], index: 7, kind: input, shape index: {}]
  %s8 = inlined_call_operand.vmem [shape: f32[1,128], index: 8, kind: input, shape index: {}]
  %s9 = inlined_call_operand.hbm [shape: f32[2,128], index: 9, kind: output, shape index: {}]
  %s10 = sld [smem:[#allocation0]]
  $region46: #{tpu_custom_call.1} parent=0
    _
  %s12 = ssub.s32 1, %s10
  %s13 = scalar_select 0, %s12, %s10
  $region1: #{tpu_custom_call.1} parent=0
    #allocation2 [shape = 'u8[1024]{0}', space=vmem, size = 0x400, scoped, tag = 'output window, operand 0, single buffered']
    #allocation3 [shape = 's32[1]{0}', space=sflag, size = 0x4, scoped, tag = 'scoped memory for tpu_custom_call.1']
    %14 = vsyncpa [#allocation3], 0
    // Predicated region
    $region2: #{tpu_custom_call.1} parent=1 // pred_check
      _
    $region3: #{tpu_custom_call.1} parent=1 // pred_check_branch
      %16 = sbr.rel (0) target = $region5
    $region4: #{tpu_custom_call.1} parent=1 // pred_region
      _
    $region5: #{tpu_custom_call.1} parent=1 // pred_fallthru
      _
    // Predicated region
    $region6: #{tpu_custom_call.1} parent=1 // pred_check
      _
    $region7: #{tpu_custom_call.1} parent=1 // pred_check_branch
      %18 = sbr.rel (0) target = $region9
    $region8: #{tpu_custom_call.1} parent=1 // pred_region
      _
    $region9: #{tpu_custom_call.1} parent=1 // pred_fallthru
      _
    // Predicated region
    $region10: #{tpu_custom_call.1} parent=1 // pred_check
      _
    $region11: #{tpu_custom_call.1} parent=1 // pred_check_branch
      %20 = sbr.rel (0) target = $region13
    $region12: #{tpu_custom_call.1} parent=1 // pred_region
      _
    $region13: #{tpu_custom_call.1} parent=1 // pred_fallthru
      _
    // Predicated region
    $region14: #{tpu_custom_call.1} parent=1 // pred_check
      _
    $region15: #{tpu_custom_call.1} parent=1 // pred_check_branch
      %22 = sbr.rel (0) target = $region17
    $region16: #{tpu_custom_call.1} parent=1 // pred_region
      _
    $region17: #{tpu_custom_call.1} parent=1 // pred_fallthru
      _
    // Predicated region
    $region18: #{tpu_custom_call.1} parent=1 // pred_check
      _
    $region19: #{tpu_custom_call.1} parent=1 // pred_check_branch
      %24 = sbr.rel (0) target = $region21
    $region20: #{tpu_custom_call.1} parent=1 // pred_region
      _
    $region21: #{tpu_custom_call.1} parent=1 // pred_fallthru
      _
    // Predicated region
    $region22: #{tpu_custom_call.1} parent=1 // pred_check
      _
    $region23: #{tpu_custom_call.1} parent=1 // pred_check_branch
      %26 = sbr.rel (0) target = $region25
    $region24: #{tpu_custom_call.1} parent=1 // pred_region
      _
    $region25: #{tpu_custom_call.1} parent=1 // pred_fallthru
      _
    // Predicated region
    $region26: #{tpu_custom_call.1} parent=1 // pred_check
      _
    $region27: #{tpu_custom_call.1} parent=1 // pred_check_branch
      %28 = sbr.rel (0) target = $region29
    $region28: #{tpu_custom_call.1} parent=1 // pred_region
      _
    $region29: #{tpu_custom_call.1} parent=1 // pred_fallthru
      _
    // Predicated region
    $region30: #{tpu_custom_call.1} parent=1 // pred_check
      _
    $region31: #{tpu_custom_call.1} parent=1 // pred_check_branch
      %30 = sbr.rel (0) target = $region33
    $region32: #{tpu_custom_call.1} parent=1 // pred_region
      _
    $region33: #{tpu_custom_call.1} parent=1 // pred_fallthru
      _
    // Predicated region
    $region34: #{tpu_custom_call.1} parent=1 // pred_check
      _
    $region35: #{tpu_custom_call.1} parent=1 // pred_check_branch
      %32 = sbr.rel (0) target = $region37
    $region36: #{tpu_custom_call.1} parent=1 // pred_region
      _
    $region37: #{tpu_custom_call.1} parent=1 // pred_fallthru
      _
    %v34 = vld [vmem:[%s0] sm:$0x1]
    %v35 = vld [vmem:[%s1] sm:$0xf]
    %v36 = vld [vmem:[%s1 + $0x4] sm:$0x7]
    %v37 = vld [vmem:[%s2] sm:$0x1]
    %v39 = vperm.slane %v37, 0
    %v43 = vunpack.c.l.b16 %v35
    %v44 = vunpack.c.l.b16 %v36
    %v45 = vpack.c.b16 %v44, %v43
    %vm46 = vcmask 105472
    %v48 = vsel %vm46, %v34, 0
    %vm50 = vcmask 1045504
    %vm51 = vcmask 1046528
    %v52 = vsel %vm50, 4294967295, 65535
    %v53 = vsel %vm51, %v52, 0
    %v55 = vand.u32 %v45, %v53
    %57 = vmatpush.bf16.msra.mxu0 0
    %58 = vmatpush.bf16.msra.mxu0 0
    %59 = vmatpush.bf16.msra.mxu0 0
    %60 = vmatpush.bf16.msra.mxu0 0
    %61 = vmatpush.bf16.msra.mxu0 0
    %62 = vmatpush.bf16.msra.mxu0 0
    %63 = vmatpush.bf16.msra.mxu0 0
    %64 = vmatpush.bf16.msra.mxu0 %v55
    %65 = vmatmul.bf16.gmra.mxu0 %v48
    %v66 = vpop.f32.mrf.mxu0
    %v67 = vadd.f32 %v39, %v66
    %v68 = vpop.f32.mrf.mxu0
    %69 = vdwg.mxu0
    %v70 = vpack.c.bf16 %v67, %v67
    %v71 = vld [vmem:[%s3] sm:$0xf]
    %v72 = vld [vmem:[%s3 + $0x4] sm:$0xf]
    %v73 = vld [vmem:[%s3 + $0x8] sm:$0xf]
    %v74 = vld [vmem:[%s3 + $0xc] sm:$0xf]
    %v75 = vld [vmem:[%s3 + $0x10] sm:$0xf]
    %v76 = vld [vmem:[%s3 + $0x14] sm:$0xf]
    %v77 = vld [vmem:[%s3 + $0x18] sm:$0xf]
    %v78 = vld [vmem:[%s3 + $0x1c] sm:$0xf]
    %v79 = vld [vmem:[%s4] sm:$0x1]
    %v81 = vperm.slane %v79, 0
    %v91 = vunpack.c.l.b16 %v71
    %v92 = vunpack.c.l.b16 %v72
    %v93 = vunpack.c.l.b16 %v73
    %v94 = vunpack.c.l.b16 %v74
    %v95 = vunpack.c.l.b16 %v75
    %v96 = vunpack.c.l.b16 %v76
    %v97 = vunpack.c.l.b16 %v77
    %v98 = vunpack.c.l.b16 %v78
    %v99 = vpack.c.b16 %v92, %v91
    %v100 = vpack.c.b16 %v94, %v93
    %v101 = vpack.c.b16 %v96, %v95
    %v102 = vpack.c.b16 %v98, %v97
    %vm107 = vcmask 523264
    %v109 = vsel %vm107, %v70, 0
    %111 = vmatpush.bf16.msra.mxu0 0
    %112 = vmatpush.bf16.msra.mxu0 0
    %113 = vmatpush.bf16.msra.mxu0 0
    %114 = vmatpush.bf16.msra.mxu0 0
    %115 = vmatpush.bf16.msra.mxu0 %v102
    %116 = vmatpush.bf16.msra.mxu0 %v101
    %117 = vmatpush.bf16.msra.mxu0 %v100
    %118 = vmatpush.bf16.msra.mxu0 %v99
    %119 = vmatmul.bf16.gmra.mxu0 %v109
    %v120 = vpop.f32.mrf.mxu0
    %v121 = vadd.f32 %v81, %v120
    %v122 = vpop.f32.mrf.mxu0
    %123 = vdwg.mxu0
    %v124 = vmax.f32 %v121, 0.0
    %v125 = vpack.c.bf16 %v124, %v124
    %v126 = vld [vmem:[%s5] sm:$0xf]
    %v127 = vld [vmem:[%s5 + $0x4] sm:$0xf]
    %v128 = vld [vmem:[%s5 + $0x8] sm:$0xf]
    %v129 = vld [vmem:[%s5 + $0xc] sm:$0xf]
    %v130 = vld [vmem:[%s6] sm:$0x1]
    %v132 = vperm.slane %v130, 0
    %v138 = vunpack.c.l.b16 %v126
    %v139 = vunpack.c.l.b16 %v127
    %v140 = vunpack.c.l.b16 %v128
    %v141 = vunpack.c.l.b16 %v129
    %v142 = vpack.c.b16 %v139, %v138
    %v143 = vpack.c.b16 %v141, %v140
    %vm146 = vcmask 261120
    %v148 = vsel %vm146, %v125, 0
    %150 = vmatpush.bf16.msra.mxu0 0
    %151 = vmatpush.bf16.msra.mxu0 0
    %152 = vmatpush.bf16.msra.mxu0 0
    %153 = vmatpush.bf16.msra.mxu0 0
    %154 = vmatpush.bf16.msra.mxu0 0
    %155 = vmatpush.bf16.msra.mxu0 0
    %156 = vmatpush.bf16.msra.mxu0 %v143
    %157 = vmatpush.bf16.msra.mxu0 %v142
    %158 = vmatmul.bf16.gmra.mxu0 %v148
    %v159 = vpop.f32.mrf.mxu0
    %v160 = vadd.f32 %v132, %v159
    %v161 = vpop.f32.mrf.mxu0
    %162 = vdwg.mxu0
    %v163 = vmax.f32 %v160, 0.0
    %v164 = vpack.c.bf16 %v163, %v163
    %v165 = vld [vmem:[%s7] sm:$0xf]
    %v166 = vld [vmem:[%s7 + $0x4] sm:$0xf]
    %v167 = vld [vmem:[%s7 + $0x8] sm:$0xf]
    %v168 = vld [vmem:[%s7 + $0xc] sm:$0xf]
    %v169 = vld [vmem:[%s8] sm:$0x1]
    %v171 = vperm.slane %v169, 0
    %v177 = vunpack.c.l.b16 %v165
    %v178 = vunpack.c.l.b16 %v166
    %v179 = vunpack.c.l.b16 %v167
    %v180 = vunpack.c.l.b16 %v168
    %v181 = vpack.c.b16 %v178, %v177
    %v182 = vpack.c.b16 %v180, %v179
    %v186 = vsel %vm146, %v164, 0
    %188 = vmatpush.bf16.msra.mxu0 0
    %189 = vmatpush.bf16.msra.mxu0 0
    %190 = vmatpush.bf16.msra.mxu0 0
    %191 = vmatpush.bf16.msra.mxu0 0
    %192 = vmatpush.bf16.msra.mxu0 0
    %193 = vmatpush.bf16.msra.mxu0 0
    %194 = vmatpush.bf16.msra.mxu0 %v182
    %195 = vmatpush.bf16.msra.mxu0 %v181
    %196 = vmatmul.bf16.gmra.mxu0 %v186
    %v197 = vpop.f32.mrf.mxu0
    %v198 = vadd.f32 %v171, %v197
    %v199 = vpop.f32.mrf.mxu0
    %200 = vdwg.mxu0
    %201 = vst [vmem:[#allocation2] sm:$0x3] %v198
    // Predicated region
    $region38: #{tpu_custom_call.1} parent=1 // pred_check
      _
    $region39: #{tpu_custom_call.1} parent=1 // pred_check_branch
      %203 = sbr.rel (0) target = $region41
    $region40: #{tpu_custom_call.1} parent=1 // pred_region
      %205 = vsyncadd [#allocation3], 0
      %s207 = sshll.u32 [#allocation2], 4
      %s208 = int_to_ptr.vmem [resolvable:$true] %s207
      %s209 = sshll.u32 %s9, 4
      %s210 = int_to_ptr.hbm [resolvable:$true] %s209
      %212 = dma.vmem_to_hbm [thread:$0]  %s208, 32, %s210, [#allocation3]
    $region41: #{tpu_custom_call.1} parent=1 // pred_fallthru
      _
    // Predicated region
    $region42: #{tpu_custom_call.1} parent=1 // pred_check
      _
    $region43: #{tpu_custom_call.1} parent=1 // pred_check_branch
      %214 = sbr.rel (0) target = $region45
    $region44: #{tpu_custom_call.1} parent=1 // pred_region
      %216 = dma.done [#allocation3], 32
    $region45: #{tpu_custom_call.1} parent=1 // pred_fallthru
      _
    %217 = vsyncpa [#allocation3], 1

</llo_original>
